<compile_context>
chip_gen: v6e
topology: v6e:2x2x1
jax: 0.10.0
libtpu: 0.0.40
codegen_flags: <defaults>
</compile_context>

<pallas_src>
import jax
import jax.numpy as jnp
from jax.experimental import pallas as pl
from jax.experimental.pallas import tpu as pltpu

EPS = 1e-5  # BatchNorm2d default eps


def m1_forward(x, conv_w, conv_b, gamma, beta):
    """x: (N, C, H, W) NCHW; conv_w: (OC, IC, KH, KW); conv_b/gamma/beta: (C,)."""
    N, C, H, W = x.shape
    OC, IC, KH, KW = conv_w.shape
    assert OC == C and IC == C, "module is Conv2d(3, 3, 3) with BatchNorm2d(3)"
    assert (H - KH + 1, W - KW + 1) == (1, 1), \
        "torch.add(y2, y1) only broadcasts when the conv output is 1x1 (H=W=3)"
    HW = H * W
    K = IC * KH * KW
    R = N * C
    inv_cnt = 1.0 / (N * HW)  # BN normalizer (biased variance, training mode)

    # ---- wrapper-side layout plumbing (plain JAX, tiny) ----------------------
    # x slab: row r = n*C + c holds x[n, c, :, :] flattened onto the lane axis.
    x2 = x.reshape(R, HW)
    # packed weights/params: row r = n*C + oc holds
    #   [ conv_w[oc].reshape(K) | conv_b[oc] | gamma[oc] | beta[oc] ]
    w_rows = jnp.tile(conv_w.reshape(OC, K), (N, 1))                      # (R, K)
    p_rows = jnp.tile(jnp.stack([conv_b, gamma, beta], axis=1), (N, 1))   # (R, 3)
    wp = jnp.concatenate([w_rows, p_rows], axis=1)                        # (R, K+3)

    def kernel(x_ref, wp_ref, o_ref):
        xv = x_ref[...]                                # (R, HW)
        wpv = wp_ref[...]                              # (R, K+3)
        b_col = wpv[:, K:K + 1]                        # (R, 1) conv bias per row
        g_col = wpv[:, K + 1:K + 2]                    # (R, 1) BN gamma per row
        be_col = wpv[:, K + 2:K + 3]                   # (R, 1) BN beta per row

        # --- BatchNorm2d (training mode: per-channel batch stats) ------------
        row_sum = jnp.sum(xv, axis=1, keepdims=True)   # (R, 1) lane reduce (XLU)
        ch_sum = row_sum[0:C, :]
        for n in range(1, N):
            ch_sum = ch_sum + row_sum[n * C:(n + 1) * C, :]
        mean_col = jnp.concatenate([ch_sum] * N, axis=0) * inv_cnt   # (R, 1)

        d = xv - mean_col
        row_sq = jnp.sum(d * d, axis=1, keepdims=True)
        ch_sq = row_sq[0:C, :]
        for n in range(1, N):
            ch_sq = ch_sq + row_sq[n * C:(n + 1) * C, :]
        var_col = jnp.concatenate([ch_sq] * N, axis=0) * inv_cnt     # (R, 1)

        inv_std = jax.lax.rsqrt(var_col + EPS)
        bn = d * inv_std * g_col + be_col              # (R, HW)

        # --- Conv2d(3,3,3), valid, on a 3x3 input -> one scalar per row ------
        # conv[r = n*C + oc] = b[oc] + sum_c sum_hw x[n, c, hw] * w[oc, c, hw]
        # VPU multiply + XLU lane reduce; kept off the MXU on purpose.
        conv_col = b_col
        for c in range(C):
            w_c = wpv[:, c * HW:(c + 1) * HW]          # (R, HW): row r -> w[oc, c, :]
            x_c = jnp.concatenate(                     # (R, HW): row r -> x[n, c, :]
                [jnp.broadcast_to(xv[n * C + c:n * C + c + 1, :], (C, HW))
                 for n in range(N)],
                axis=0)
            conv_col = conv_col + jnp.sum(x_c * w_c, axis=1, keepdims=True)

        # --- torch.add(y2, y1): conv scalar broadcasts over the lane axis ----
        o_ref[...] = bn + conv_col

    cost = pl.CostEstimate(
        flops=2 * R * HW * (C + 3),                    # ~conv + BN arithmetic
        transcendentals=R,                             # rsqrt column
        bytes_accessed=4 * (R * HW + R * (K + 3) + R * HW))

    out = pl.pallas_call(
        kernel,
        out_shape=jax.ShapeDtypeStruct((R, HW), x.dtype),
        in_specs=[pl.BlockSpec(memory_space=pltpu.MemorySpace.VMEM)] * 2,
        out_specs=pl.BlockSpec(memory_space=pltpu.MemorySpace.VMEM),
        cost_estimate=cost,
    )(x2, wp)
    return out.reshape(N, C, H, W)


def ref_forward(x, conv_w, conv_b, gamma, beta):
    """Plain-JAX reference matching PyTorch semantics (training-mode BN)."""
    conv = jax.lax.conv_general_dilated(
        x, conv_w, window_strides=(1, 1), padding="VALID",
        dimension_numbers=("NCHW", "OIHW", "NCHW"))
    conv = conv + conv_b.reshape(1, -1, 1, 1)
    mean = jnp.mean(x, axis=(0, 2, 3), keepdims=True)
    var = jnp.mean((x - mean) ** 2, axis=(0, 2, 3), keepdims=True)
    bn = (x - mean) * jax.lax.rsqrt(var + EPS)
    bn = bn * gamma.reshape(1, -1, 1, 1) + beta.reshape(1, -1, 1, 1)
    return bn + conv


if __name__ == "__main__":
    key = jax.random.PRNGKey(0)
    kx, kw, kb = jax.random.split(key, 3)

    # batch=2; Conv2d(3,3,3) + the broadcasting add force 3x3 spatial.
    N, C, H, W = 2, 3, 3, 3
    x = jax.random.normal(kx, (N, C, H, W), dtype=jnp.float32)

    # Deterministic parameter init (synthetic, not a checkpoint load).
    conv_w = 0.1 * jax.random.normal(kw, (3, 3, 3, 3), dtype=jnp.float32)
    conv_b = 0.1 * jax.random.normal(kb, (3,), dtype=jnp.float32)
    gamma = jnp.ones((3,), dtype=jnp.float32)   # BatchNorm2d default weight
    beta = jnp.zeros((3,), dtype=jnp.float32)   # BatchNorm2d default bias

    out = jax.block_until_ready(m1_forward(x, conv_w, conv_b, gamma, beta))
    ref = ref_forward(x, conv_w, conv_b, gamma, beta)
    assert out.shape == (N, C, H, W)
    assert jnp.allclose(out, ref, atol=1e-5, rtol=1e-5), "mismatch vs reference"

    print("KERNEL_OK")
</pallas_src>

<mosaic_0001>
module attributes {stable_mosaic.version = 11 : i64} {
  func.func @kernel(%arg0: memref<6x9xf32, #tpu.memory_space<vmem>>, %arg1: memref<6x30xf32, #tpu.memory_space<vmem>>, %arg2: memref<6x9xf32, #tpu.memory_space<vmem>>) attributes {dimension_semantics = [], scalar_prefetch = 0 : i64, scratch_operands = 0 : i64, tpu.core_type = #tpu.core_type<tc>} {
    %c0 = arith.constant 0 : index
    %c0_0 = arith.constant 0 : index
    %0 = vector.load %arg0[%c0, %c0_0] : memref<6x9xf32, #tpu.memory_space<vmem>>, vector<6x9xf32>
    %c0_1 = arith.constant 0 : index
    %c0_2 = arith.constant 0 : index
    %1 = vector.load %arg1[%c0_1, %c0_2] : memref<6x30xf32, #tpu.memory_space<vmem>>, vector<6x30xf32>
    %2 = vector.extract_strided_slice %1 {offsets = [0, 27], sizes = [6, 1], strides = [1, 1]} : vector<6x30xf32> to vector<6x1xf32>
    %3 = vector.extract_strided_slice %1 {offsets = [0, 28], sizes = [6, 1], strides = [1, 1]} : vector<6x30xf32> to vector<6x1xf32>
    %4 = vector.extract_strided_slice %1 {offsets = [0, 29], sizes = [6, 1], strides = [1, 1]} : vector<6x30xf32> to vector<6x1xf32>
    %cst = arith.constant dense<0.000000e+00> : vector<6xf32>
    %5 = vector.multi_reduction <add>, %0, %cst [1] : vector<6x9xf32> to vector<6xf32>
    %6 = vector.shape_cast %5 : vector<6xf32> to vector<6x1xf32>
    %7 = vector.extract_strided_slice %6 {offsets = [0, 0], sizes = [3, 1], strides = [1, 1]} : vector<6x1xf32> to vector<3x1xf32>
    %8 = vector.extract_strided_slice %6 {offsets = [3, 0], sizes = [3, 1], strides = [1, 1]} : vector<6x1xf32> to vector<3x1xf32>
    %9 = arith.addf %7, %8 : vector<3x1xf32>
    %10 = tpu.concatenate %9, %9 in 0 : vector<3x1xf32>, vector<3x1xf32> -> vector<6x1xf32>
    %cst_3 = arith.constant 0.055555556 : f32
    %11 = vector.broadcast %cst_3 : f32 to vector<6x1xf32>
    %12 = arith.mulf %10, %11 : vector<6x1xf32>
    %13 = vector.broadcast %12 : vector<6x1xf32> to vector<6x9xf32>
    %14 = arith.subf %0, %13 : vector<6x9xf32>
    %15 = arith.mulf %14, %14 : vector<6x9xf32>
    %cst_4 = arith.constant dense<0.000000e+00> : vector<6xf32>
    %16 = vector.multi_reduction <add>, %15, %cst_4 [1] : vector<6x9xf32> to vector<6xf32>
    %17 = vector.shape_cast %16 : vector<6xf32> to vector<6x1xf32>
    %18 = vector.extract_strided_slice %17 {offsets = [0, 0], sizes = [3, 1], strides = [1, 1]} : vector<6x1xf32> to vector<3x1xf32>
    %19 = vector.extract_strided_slice %17 {offsets = [3, 0], sizes = [3, 1], strides = [1, 1]} : vector<6x1xf32> to vector<3x1xf32>
    %20 = arith.addf %18, %19 : vector<3x1xf32>
    %21 = tpu.concatenate %20, %20 in 0 : vector<3x1xf32>, vector<3x1xf32> -> vector<6x1xf32>
    %cst_5 = arith.constant 0.055555556 : f32
    %22 = vector.broadcast %cst_5 : f32 to vector<6x1xf32>
    %23 = arith.mulf %21, %22 : vector<6x1xf32>
    %cst_6 = arith.constant 9.99999974E-6 : f32
    %24 = vector.broadcast %cst_6 : f32 to vector<6x1xf32>
    %25 = arith.addf %23, %24 : vector<6x1xf32>
    %26 = math.rsqrt %25 : vector<6x1xf32>
    %27 = vector.broadcast %26 : vector<6x1xf32> to vector<6x9xf32>
    %28 = arith.mulf %14, %27 : vector<6x9xf32>
    %29 = vector.broadcast %3 : vector<6x1xf32> to vector<6x9xf32>
    %30 = arith.mulf %28, %29 : vector<6x9xf32>
    %31 = vector.broadcast %4 : vector<6x1xf32> to vector<6x9xf32>
    %32 = arith.addf %30, %31 : vector<6x9xf32>
    %33 = vector.extract_strided_slice %1 {offsets = [0, 0], sizes = [6, 9], strides = [1, 1]} : vector<6x30xf32> to vector<6x9xf32>
    %34 = vector.extract_strided_slice %0 {offsets = [0, 0], sizes = [1, 9], strides = [1, 1]} : vector<6x9xf32> to vector<1x9xf32>
    %35 = vector.shape_cast %34 : vector<1x9xf32> to vector<1x9xf32>
    %36 = vector.broadcast %35 : vector<1x9xf32> to vector<3x9xf32>
    %37 = vector.extract_strided_slice %0 {offsets = [3, 0], sizes = [1, 9], strides = [1, 1]} : vector<6x9xf32> to vector<1x9xf32>
    %38 = vector.shape_cast %37 : vector<1x9xf32> to vector<1x9xf32>
    %39 = vector.broadcast %38 : vector<1x9xf32> to vector<3x9xf32>
    %40 = tpu.concatenate %36, %39 in 0 : vector<3x9xf32>, vector<3x9xf32> -> vector<6x9xf32>
    %41 = arith.mulf %40, %33 : vector<6x9xf32>
    %cst_7 = arith.constant dense<0.000000e+00> : vector<6xf32>
    %42 = vector.multi_reduction <add>, %41, %cst_7 [1] : vector<6x9xf32> to vector<6xf32>
    %43 = vector.shape_cast %42 : vector<6xf32> to vector<6x1xf32>
    %44 = arith.addf %2, %43 : vector<6x1xf32>
    %45 = vector.extract_strided_slice %1 {offsets = [0, 9], sizes = [6, 9], strides = [1, 1]} : vector<6x30xf32> to vector<6x9xf32>
    %46 = vector.extract_strided_slice %0 {offsets = [1, 0], sizes = [1, 9], strides = [1, 1]} : vector<6x9xf32> to vector<1x9xf32>
    %47 = vector.shape_cast %46 : vector<1x9xf32> to vector<1x9xf32>
    %48 = vector.broadcast %47 : vector<1x9xf32> to vector<3x9xf32>
    %49 = vector.extract_strided_slice %0 {offsets = [4, 0], sizes = [1, 9], strides = [1, 1]} : vector<6x9xf32> to vector<1x9xf32>
    %50 = vector.shape_cast %49 : vector<1x9xf32> to vector<1x9xf32>
    %51 = vector.broadcast %50 : vector<1x9xf32> to vector<3x9xf32>
    %52 = tpu.concatenate %48, %51 in 0 : vector<3x9xf32>, vector<3x9xf32> -> vector<6x9xf32>
    %53 = arith.mulf %52, %45 : vector<6x9xf32>
    %cst_8 = arith.constant dense<0.000000e+00> : vector<6xf32>
    %54 = vector.multi_reduction <add>, %53, %cst_8 [1] : vector<6x9xf32> to vector<6xf32>
    %55 = vector.shape_cast %54 : vector<6xf32> to vector<6x1xf32>
    %56 = arith.addf %44, %55 : vector<6x1xf32>
    %57 = vector.extract_strided_slice %1 {offsets = [0, 18], sizes = [6, 9], strides = [1, 1]} : vector<6x30xf32> to vector<6x9xf32>
    %58 = vector.extract_strided_slice %0 {offsets = [2, 0], sizes = [1, 9], strides = [1, 1]} : vector<6x9xf32> to vector<1x9xf32>
    %59 = vector.shape_cast %58 : vector<1x9xf32> to vector<1x9xf32>
    %60 = vector.broadcast %59 : vector<1x9xf32> to vector<3x9xf32>
    %61 = vector.extract_strided_slice %0 {offsets = [5, 0], sizes = [1, 9], strides = [1, 1]} : vector<6x9xf32> to vector<1x9xf32>
    %62 = vector.shape_cast %61 : vector<1x9xf32> to vector<1x9xf32>
    %63 = vector.broadcast %62 : vector<1x9xf32> to vector<3x9xf32>
    %64 = tpu.concatenate %60, %63 in 0 : vector<3x9xf32>, vector<3x9xf32> -> vector<6x9xf32>
    %65 = arith.mulf %64, %57 : vector<6x9xf32>
    %cst_9 = arith.constant dense<0.000000e+00> : vector<6xf32>
    %66 = vector.multi_reduction <add>, %65, %cst_9 [1] : vector<6x9xf32> to vector<6xf32>
    %67 = vector.shape_cast %66 : vector<6xf32> to vector<6x1xf32>
    %68 = arith.addf %56, %67 : vector<6x1xf32>
    %69 = vector.broadcast %68 : vector<6x1xf32> to vector<6x9xf32>
    %70 = arith.addf %32, %69 : vector<6x9xf32>
    %c0_10 = arith.constant 0 : index
    %c0_11 = arith.constant 0 : index
    %71 = vector.load %arg2[%c0_10, %c0_11] : memref<6x9xf32, #tpu.memory_space<vmem>>, vector<6x9xf32>
    tpu.vector_store %arg2[%c0_10, %c0_11], %70 {strides = array<i32>} : memref<6x9xf32, #tpu.memory_space<vmem>>, vector<6x9xf32>,
    return
  }
}

</mosaic_0001>

<llo_original>
// kernel: tpu_custom_call.1
$region0: #{tpu_custom_call.1}
  #allocation0 [shape = 'u32[]', space=smem, size = 0x4, offset = 0x4, fixed_abs, tag = 'smem constant byte address 0x4 - core index']
  #allocation1 [shape = 'u32[144,128]{1,0:T(1,128)}', space=vmem, size = 0x12000, scoped, tag = 'internal scratch']
  %s0 = inlined_call_operand.hbm [shape: f32[6,9], index: 0, kind: input, shape index: {}]
  %s1 = inlined_call_operand.hbm [shape: f32[6,30], index: 1, kind: input, shape index: {}]
  %s2 = inlined_call_operand.hbm [shape: f32[6,9], index: 2, kind: output, shape index: {}]
  %s3 = sld [smem:[#allocation0]]
  $region26: #{tpu_custom_call.1} parent=0
    _
  %s5 = ssub.s32 1, %s3
  %s6 = scalar_select 0, %s5, %s3
  $region1: #{tpu_custom_call.1} parent=0
    #allocation2 [shape = 'u8[4096]{0}', space=vmem, size = 0x1000, scoped, tag = 'input window, operand 0, single buffered']
    #allocation3 [shape = 's32[1]{0}', space=sflag, size = 0x4, scoped, tag = 'scoped memory for tpu_custom_call.1']
    #allocation4 [shape = 's32[1]{0}', space=sflag, size = 0x4, scoped, tag = 'scoped memory for tpu_custom_call.1']
    #allocation5 [shape = 'u8[4096]{0}', space=vmem, size = 0x1000, scoped, tag = 'input window, operand 1, single buffered']
    #allocation6 [shape = 's32[1]{0}', space=sflag, size = 0x4, scoped, tag = 'scoped memory for tpu_custom_call.1']
    #allocation7 [shape = 'u8[4096]{0}', space=vmem, size = 0x1000, scoped, tag = 'output window, operand 0, single buffered']
    %7 = vsyncpa [#allocation3], 0
    %8 = vsyncpa [#allocation6], 0
    %9 = vsyncpa [#allocation4], 0
    // Predicated region
    $region2: #{tpu_custom_call.1} parent=1 // pred_check
      _
    $region3: #{tpu_custom_call.1} parent=1 // pred_check_branch
      %11 = sbr.rel (0) target = $region5
    $region4: #{tpu_custom_call.1} parent=1 // pred_region
      %s13 = ssub.s32 128, 128
      %14 = vsyncadd [#allocation3], %s13
      %s16 = sshll.u32 [#allocation2], 4
      %s17 = int_to_ptr.vmem [resolvable:$true] %s16
      %19 = dma.hbm_to_vmem [thread:$0]  %s0, 128, %s17, [#allocation3]
    $region5: #{tpu_custom_call.1} parent=1 // pred_fallthru
      _
    // Predicated region
    $region6: #{tpu_custom_call.1} parent=1 // pred_check
      _
    $region7: #{tpu_custom_call.1} parent=1 // pred_check_branch
      %21 = sbr.rel (0) target = $region9
    $region8: #{tpu_custom_call.1} parent=1 // pred_region
      %s23 = ssub.s32 128, 128
      %24 = vsyncadd [#allocation6], %s23
      %s26 = sshll.u32 [#allocation5], 4
      %s27 = int_to_ptr.vmem [resolvable:$true] %s26
      %29 = dma.hbm_to_vmem [thread:$0]  %s1, 128, %s27, [#allocation6]
    $region9: #{tpu_custom_call.1} parent=1 // pred_fallthru
      _
    // Predicated region
    $region10: #{tpu_custom_call.1} parent=1 // pred_check
      _
    $region11: #{tpu_custom_call.1} parent=1 // pred_check_branch
      %31 = sbr.rel (0) target = $region13
    $region12: #{tpu_custom_call.1} parent=1 // pred_region
      %32 = dma.done [#allocation3], 128
    $region13: #{tpu_custom_call.1} parent=1 // pred_fallthru
      _
    // Predicated region
    $region14: #{tpu_custom_call.1} parent=1 // pred_check
      _
    $region15: #{tpu_custom_call.1} parent=1 // pred_check_branch
      %34 = sbr.rel (0) target = $region17
    $region16: #{tpu_custom_call.1} parent=1 // pred_region
      %35 = dma.done [#allocation6], 128
    $region17: #{tpu_custom_call.1} parent=1 // pred_fallthru
      _
    %v36 = vld [vmem:[#allocation2] sm:$0x3f]
    %v37 = vld [vmem:[#allocation5] sm:$0x3f]
    %vm38 = vcmask 70656
    %v39 = vsel %vm38, %v36, 0.0
    %40 = vadd.xlane.f32.xlu0 %v39
    %v41 = vpop.xlane.xlu0 %40
    %v43 = vrot.slane %v41, 3
    %v45 = vadd.f32 %v41, %v43
    %v47 = vrot.slane %v45, 5
    %vm49 = vcmask 1042432
    %v50 = vsel %vm49, %v45, %v47
    %v51 = vmul.f32 %v50, 0.055555556
    %53 = vset.pattern.permute.xlu0 0
    %54 = vperm.xlu0 %53, %v51
    %v55 = vpop.permute.xlu0 %54
    %v57 = vsub.f32 %v36, %v55
    %v58 = vmul.f32 %v57, %v57
    %v59 = vsel %vm38, %v58, 0.0
    %60 = vadd.xlane.f32.xlu0 %v59
    %v61 = vpop.xlane.xlu0 %60
    %v63 = vrot.slane %v61, 3
    %v65 = vadd.f32 %v61, %v63
    %v67 = vrot.slane %v65, 5
    %v69 = vsel %vm49, %v65, %v67
    %v70 = vmul.f32 %v69, 0.055555556
    %v71 = vadd.f32 %v70, 1e-05
    %v72 = vrsqrt.pop %v71
    %74 = vset.pattern.permute.xlu0 0
    %75 = vperm.xlu0 %74, %v72
    %v76 = vpop.permute.xlu0 %75
    %v78 = vmul.f32 %v57, %v76
    %80 = vset.pattern.permute.xlu0 28
    %81 = vperm.xlu0 %80, %v37
    %v82 = vpop.permute.xlu0 %81
    %v84 = vmul.f32 %v78, %v82
    %85 = vset.pattern.permute.xlu0 29
    %86 = vperm.xlu0 %85, %v37
    %v87 = vpop.permute.xlu0 %86
    %v89 = vadd.f32 %v84, %v87
    %v90 = vlaneseq
    %v91 = vshrl.u32 %v90, 7
    %v92 = vsub.s32 0, %v91
    %v93 = vrot.slane %v36, %v92
    %v94 = vlaneseq
    %v95 = vshrl.u32 %v94, 7
    %v96 = vsub.s32 3, %v95
    %v97 = vrot.slane %v36, %v96
    %v98 = vsel %vm49, %v93, %v97
    %v99 = vmul.f32 %v98, %v37
    %v100 = vsel %vm38, %v99, 0.0
    %101 = vadd.xlane.f32.xlu0 %v100
    %v102 = vpop.xlane.xlu0 %101
    %v103 = vadd.f32 %v37, %v102
    %v104 = vlaneseq
    %v105 = vshrl.u32 %v104, 7
    %v106 = vsub.s32 1, %v105
    %v107 = vrot.slane %v36, %v106
    %v108 = vlaneseq
    %v109 = vshrl.u32 %v108, 7
    %v110 = vsub.s32 4, %v109
    %v111 = vrot.slane %v36, %v110
    %v112 = vsel %vm49, %v107, %v111
    %113 = vrot.lane.b32.xlu0 %v37, 119
    %v114 = vpop.permute.xlu0 %113
    %v116 = vmul.f32 %v112, %v114
    %v117 = vsel %vm38, %v116, 0.0
    %118 = vadd.xlane.f32.xlu0 %v117
    %v119 = vpop.xlane.xlu0 %118
    %v120 = vadd.f32 %v103, %v119
    %v121 = vlaneseq
    %v122 = vshrl.u32 %v121, 7
    %v123 = vsub.s32 2, %v122
    %v124 = vrot.slane %v36, %v123
    %v125 = vlaneseq
    %v126 = vshrl.u32 %v125, 7
    %v127 = vsub.s32 5, %v126
    %v128 = vrot.slane %v36, %v127
    %v129 = vsel %vm49, %v124, %v128
    %130 = vrot.lane.b32.xlu0 %v37, 110
    %v131 = vpop.permute.xlu0 %130
    %v133 = vmul.f32 %v129, %v131
    %v134 = vsel %vm38, %v133, 0.0
    %135 = vadd.xlane.f32.xlu0 %v134
    %v136 = vpop.xlane.xlu0 %135
    %v137 = vadd.f32 %v120, %v136
    %139 = vset.pattern.permute.xlu0 27
    %140 = vperm.xlu0 %139, %v137
    %v141 = vpop.permute.xlu0 %140
    %v143 = vadd.f32 %v89, %v141
    %144 = vst.msk [vmem:[#allocation7] sm:$0x3f] %vm38, %v143
    // Predicated region
    $region18: #{tpu_custom_call.1} parent=1 // pred_check
      _
    $region19: #{tpu_custom_call.1} parent=1 // pred_check_branch
      %146 = sbr.rel (0) target = $region21
    $region20: #{tpu_custom_call.1} parent=1 // pred_region
      %s148 = ssub.s32 128, 128
      %149 = vsyncadd [#allocation4], %s148
      %s151 = sshll.u32 [#allocation7], 4
      %s152 = int_to_ptr.vmem [resolvable:$true] %s151
      %154 = dma.vmem_to_hbm [thread:$0]  %s152, 128, %s2, [#allocation4]
    $region21: #{tpu_custom_call.1} parent=1 // pred_fallthru
      _
    // Predicated region
    $region22: #{tpu_custom_call.1} parent=1 // pred_check
      _
    $region23: #{tpu_custom_call.1} parent=1 // pred_check_branch
      %156 = sbr.rel (0) target = $region25
    $region24: #{tpu_custom_call.1} parent=1 // pred_region
      %157 = dma.done [#allocation4], 128
    $region25: #{tpu_custom_call.1} parent=1 // pred_fallthru
      _
    %158 = vsyncpa [#allocation3], 1
    %159 = vsyncpa [#allocation6], 1
    %160 = vsyncpa [#allocation4], 1

</llo_original>
